<compile_context>
chip_gen: v5e
topology: v5e:2x2
jax: 0.10.0
libtpu: 0.0.40
codegen_flags: <defaults>
</compile_context>

<pallas_src>
import functools

import jax
import jax.numpy as jnp
from jax.experimental import pallas as pl
from jax.experimental.pallas import tpu as pltpu


# ----------------------------- interpolation matrices (host side) -----------------------

def _bilinear_matrix(out_size: int, in_size: int) -> jnp.ndarray:
    """1-D bilinear interpolation matrix, PyTorch align_corners=False semantics."""
    scale = in_size / out_size
    o = jnp.arange(out_size, dtype=jnp.float32)
    src = (o + 0.5) * scale - 0.5
    src = jnp.maximum(src, 0.0)                       # PyTorch clamps negative src to 0
    i0 = jnp.floor(src).astype(jnp.int32)
    i0 = jnp.clip(i0, 0, in_size - 1)
    i1 = jnp.minimum(i0 + 1, in_size - 1)
    w1 = src - i0.astype(jnp.float32)
    w0 = 1.0 - w1
    rows = jnp.arange(out_size)
    m = jnp.zeros((out_size, in_size), jnp.float32)
    m = m.at[rows, i0].add(w0)
    m = m.at[rows, i1].add(w1)
    return m


def _pick_h_tile(h_out: int, max_tile: int = 256) -> int:
    """Largest multiple-of-16 divisor of h_out that is <= max_tile, else the full extent."""
    t = max_tile
    while t >= 16:
        if h_out % t == 0:
            return t
        t //= 2
    return h_out


# ----------------------------------- Pallas kernel --------------------------------------

def _resize_kernel(idxs_ref, bias_ref, a_ref, bt_ref, o_ref, *, a_first: bool):
    # idxs_ref: scalar-prefetch ref (consumed only by the bias BlockSpec index_map).
    # bias_ref: (1, 1, Hin, Win) bf16  -- the camera slice selected by idxs[b]
    # a_ref:    (TH, Hin)        bf16  -- row-interpolation tile for this Hout tile
    # bt_ref:   (Win, Wp)        bf16  -- pre-transposed (and lane-padded) col matrix
    # o_ref:    (1, 1, TH, Wp)   f32
    del idxs_ref
    x = bias_ref[0, 0]                                    # (Hin, Win) bf16
    if a_first:                                           # (A @ X) @ B^T
        tmp = jnp.dot(a_ref[...], x, preferred_element_type=jnp.float32)
        out = jnp.dot(tmp.astype(jnp.bfloat16), bt_ref[...],
                      preferred_element_type=jnp.float32)
    else:                                                 # A @ (X @ B^T)
        tmp = jnp.dot(x, bt_ref[...], preferred_element_type=jnp.float32)
        out = jnp.dot(a_ref[...], tmp.astype(jnp.bfloat16),
                      preferred_element_type=jnp.float32)
    o_ref[0, 0] = out


# ------------------------------------ wrapper --------------------------------------------

def camera_pixel_bias_forward(idxs, bias, image_height, image_width):
    """idxs: (B,) int32 camera ids; bias: (n_cam, 1, W//ds, H//ds) float32.
    Returns (B, 1, image_height, image_width) float32."""
    n_cam, _, h_in, w_in = bias.shape        # h_in = image_width//ds, w_in = image_height//ds
    h_out, w_out = int(image_height), int(image_width)
    batch = int(idxs.shape[0])

    # bf16 operands, f32 MXU accumulation; output stays f32.
    a_mat = _bilinear_matrix(h_out, h_in).astype(jnp.bfloat16)       # (Hout, Hin)
    bt_mat = _bilinear_matrix(w_out, w_in).T.astype(jnp.bfloat16)    # (Win, Wout) pre-transposed
    bias_bf = bias.astype(jnp.bfloat16)

    # Lane-dense output stores: pad Wout to a multiple of 128 when it is large & ragged.
    # Padded columns of B^T are zero and the extra output columns are sliced off below.
    w_pad = w_out
    if w_out >= 128 and w_out % 128 != 0:
        w_pad = ((w_out + 127) // 128) * 128
        bt_mat = jnp.pad(bt_mat, ((0, 0), (0, w_pad - w_out)))

    # Tile the Hout axis so per-step VMEM stays bounded (v7x has only 64 MiB VMEM).
    th = _pick_h_tile(h_out)
    n_h = h_out // th

    # Matmul association order from static shapes (per Hout tile; A@(X@B^T) recomputes
    # X@B^T once per Hout tile, accounted for in the cost below).
    cost_a_first = th * h_in * w_in + th * w_in * w_pad
    cost_x_first = h_in * w_in * w_pad + th * h_in * w_pad
    a_first = cost_a_first <= cost_x_first

    flops = 2 * batch * n_h * (cost_a_first if a_first else cost_x_first)
    bytes_accessed = (batch * (h_in * w_in * 2 + h_out * w_pad * 4)
                      + (h_out * h_in + w_in * w_pad) * 2 + batch * 4)

    kernel = functools.partial(_resize_kernel, a_first=a_first)

    def build(single_buffer_consts: bool):
        const_pm = pl.Buffered(1) if single_buffer_consts else None
        a_pm = const_pm if n_h == 1 else None        # A varies with the Hout tile axis
        grid_spec = pltpu.PrefetchScalarGridSpec(
            num_scalar_prefetch=1,
            grid=(batch, n_h),
            in_specs=[
                # camera gather: block index along the camera axis is data-dependent
                pl.BlockSpec((1, 1, h_in, w_in),
                             lambda b, h, idxs: (idxs[b], 0, 0, 0)),
                pl.BlockSpec((th, h_in), lambda b, h, idxs: (h, 0),
                             pipeline_mode=a_pm),
                pl.BlockSpec((w_in, w_pad), lambda b, h, idxs: (0, 0),
                             pipeline_mode=const_pm),
            ],
            out_specs=pl.BlockSpec((1, 1, th, w_pad),
                                   lambda b, h, idxs: (b, 0, h, 0)),
        )
        return pl.pallas_call(
            kernel,
            out_shape=jax.ShapeDtypeStruct((batch, 1, h_out, w_pad), jnp.float32),
            grid_spec=grid_spec,
            compiler_params=pltpu.CompilerParams(
                dimension_semantics=("parallel", "parallel")),
            cost_estimate=pl.CostEstimate(
                flops=flops, transcendentals=0, bytes_accessed=bytes_accessed),
        )

    try:
        out = build(True)(idxs, bias_bf, a_mat, bt_mat)
    except Exception:
        # Compatibility fallback: identical kernel, default (double) buffering for the
        # grid-invariant matrices if pipeline_mode=pl.Buffered(1) is unavailable.
        out = build(False)(idxs, bias_bf, a_mat, bt_mat)

    if w_pad != w_out:
        out = out[..., :w_out]
    return out


# -------------------------------------- demo / test -------------------------------------

if __name__ == "__main__":
    # Module hyper-params (small, consistent with the forward pass).
    image_height, image_width = 16, 16
    ds_rate = 2
    cameras = ["cam0", "cam1", "cam2", "cam3"]
    n_cameras = len(cameras)

    # Deterministic inputs (module inits bias to zeros; use random values so the
    # interpolation is actually exercised).
    key = jax.random.PRNGKey(0)
    k_bias, k_idx = jax.random.split(key)
    bias = jax.random.normal(
        k_bias,
        (n_cameras, 1, image_width // ds_rate, image_height // ds_rate),
        dtype=jnp.float32,
    )
    idxs = jax.random.randint(k_idx, (2,), 0, n_cameras, dtype=jnp.int32)

    out = camera_pixel_bias_forward(idxs, bias, image_height, image_width)
    out = jax.block_until_ready(out)

    # Reference (plain JAX, f32) == PyTorch F.interpolate(mode='bilinear',
    # align_corners=False) applied to bias[idxs].
    a_f32 = _bilinear_matrix(image_height, image_width // ds_rate)
    b_f32 = _bilinear_matrix(image_width, image_height // ds_rate)
    ref = jnp.einsum("oh,bchw,pw->bcop", a_f32, bias[idxs], b_f32)

    assert out.shape == (2, 1, image_height, image_width)
    assert out.dtype == jnp.float32
    # bf16 operands / f32 accumulation: ~3 significant digits on the bias values.
    err = float(jnp.max(jnp.abs(out - ref)))
    assert jnp.allclose(out, ref, atol=3e-2, rtol=3e-2), err
    print("KERNEL_OK")
</pallas_src>

<mosaic_0001>
module attributes {stable_mosaic.version = 11 : i64} {
  func.func @_resize_kernel(%arg0: i32, %arg1: i32, %arg2: memref<2xi32, #tpu.memory_space<smem>>, %arg3: memref<1x1x8x8xbf16, #tpu.memory_space<vmem>>, %arg4: memref<16x8xbf16, #tpu.memory_space<vmem>>, %arg5: memref<8x16xbf16, #tpu.memory_space<vmem>>, %arg6: memref<1x1x16x16xf32, #tpu.memory_space<vmem>>) attributes {dimension_semantics = [#tpu.dimension_semantics<parallel>, #tpu.dimension_semantics<parallel>], iteration_bounds = array<i64: 2, 1>, scalar_prefetch = 1 : i64, scratch_operands = 0 : i64, tpu.core_type = #tpu.core_type<tc>, window_params = [{transform_indices = @transform_0, window_bounds = array<i64: 1, 1, 8, 8>}, {pipeline_mode = #tpu.pipeline_mode<synchronous>, transform_indices = @transform_1, window_bounds = array<i64: 16, 8>}, {pipeline_mode = #tpu.pipeline_mode<synchronous>, transform_indices = @transform_2, window_bounds = array<i64: 8, 16>}, {transform_indices = @transform_3, window_bounds = array<i64: 1, 1, 16, 16>}]} {
    %c0 = arith.constant 0 : index
    %c0_0 = arith.constant 0 : index
    %c0_1 = arith.constant 0 : index
    %c0_2 = arith.constant 0 : index
    %0 = vector.load %arg3[%c0, %c0_0, %c0_1, %c0_2] : memref<1x1x8x8xbf16, #tpu.memory_space<vmem>>, vector<1x1x8x8xbf16>
    %1 = vector.shape_cast %0 : vector<1x1x8x8xbf16> to vector<8x8xbf16>
    %c0_3 = arith.constant 0 : index
    %c0_4 = arith.constant 0 : index
    %2 = vector.load %arg4[%c0_3, %c0_4] : memref<16x8xbf16, #tpu.memory_space<vmem>>, vector<16x8xbf16>
    %cst = arith.constant dense<0.000000e+00> : vector<16x8xf32>
    %3 = tpu.matmul %2, %1, %cst {dimension_numbers = #tpu.dot_dimension_numbers<[1], [0], [0], [1], [0, 0, 1, 1], [], []>} : vector<16x8xbf16>, vector<8x8xbf16>, vector<16x8xf32> -> vector<16x8xf32>
    %4 = arith.truncf %3 : vector<16x8xf32> to vector<16x8xbf16>
    %c0_5 = arith.constant 0 : index
    %c0_6 = arith.constant 0 : index
    %5 = vector.load %arg5[%c0_5, %c0_6] : memref<8x16xbf16, #tpu.memory_space<vmem>>, vector<8x16xbf16>
    %cst_7 = arith.constant dense<0.000000e+00> : vector<16x16xf32>
    %6 = tpu.matmul %4, %5, %cst_7 {dimension_numbers = #tpu.dot_dimension_numbers<[1], [0], [0], [1], [0, 0, 1, 1], [], []>} : vector<16x8xbf16>, vector<8x16xbf16>, vector<16x16xf32> -> vector<16x16xf32>
    %c0_8 = arith.constant 0 : index
    %c0_9 = arith.constant 0 : index
    %c0_10 = arith.constant 0 : index
    %c0_11 = arith.constant 0 : index
    %7 = vector.load %arg6[%c0_8, %c0_9, %c0_10, %c0_11] : memref<1x1x16x16xf32, #tpu.memory_space<vmem>>, vector<1x1x16x16xf32>
    %8 = vector.shape_cast %7 : vector<1x1x16x16xf32> to vector<16x16xf32>
    %9 = vector.shape_cast %6 : vector<16x16xf32> to vector<1x1x16x16xf32>
    tpu.vector_store %arg6[%c0_8, %c0_9, %c0_10, %c0_11], %9 {strides = array<i32>} : memref<1x1x16x16xf32, #tpu.memory_space<vmem>>, vector<1x1x16x16xf32>,
    return
  }
  func.func @transform_0(%arg0: i32, %arg1: i32, %arg2: memref<2xi32, #tpu.memory_space<smem>>) -> (i32, i32, i32, i32) {
    %0 = arith.index_cast %arg0 : i32 to index
    %1 = memref.load %arg2[%0] : memref<2xi32, #tpu.memory_space<smem>>
    %c0_i32 = arith.constant 0 : i32
    %c0_i32_0 = arith.constant 0 : i32
    %c0_i32_1 = arith.constant 0 : i32
    %c0_i32_2 = arith.constant 0 : i32
    return %1, %c0_i32, %c0_i32_0, %c0_i32_1 : i32, i32, i32, i32
  }
  func.func @transform_1(%arg0: i32, %arg1: i32, %arg2: memref<2xi32, #tpu.memory_space<smem>>) -> (i32, i32) {
    %c0_i32 = arith.constant 0 : i32
    %c0_i32_0 = arith.constant 0 : i32
    return %arg1, %c0_i32 : i32, i32
  }
  func.func @transform_2(%arg0: i32, %arg1: i32, %arg2: memref<2xi32, #tpu.memory_space<smem>>) -> (i32, i32) {
    %c0_i32 = arith.constant 0 : i32
    %c0_i32_0 = arith.constant 0 : i32
    %c0_i32_1 = arith.constant 0 : i32
    return %c0_i32, %c0_i32_0 : i32, i32
  }
  func.func @transform_3(%arg0: i32, %arg1: i32, %arg2: memref<2xi32, #tpu.memory_space<smem>>) -> (i32, i32, i32, i32) {
    %c0_i32 = arith.constant 0 : i32
    %c0_i32_0 = arith.constant 0 : i32
    %c0_i32_1 = arith.constant 0 : i32
    return %arg0, %c0_i32, %arg1, %c0_i32_0 : i32, i32, i32, i32
  }
}

module attributes {stable_mosaic.version = 11 : i64} {
  func.func @_resize_kernel(%arg0: i32, %arg1: i32, %arg2: memref<2xi32, #tpu.memory_space<smem>>, %arg3: memref<1x1x8x8xbf16, #tpu.memory_space<vmem>>, %arg4: memref<16x8xbf16, #tpu.memory_space<vmem>>, %arg5: memref<8x16xbf16, #tpu.memory_space<vmem>>, %arg6: memref<1x1x16x16xf32, #tpu.memory_space<vmem>>) attributes {dimension_semantics = [#tpu.dimension_semantics<parallel>, #tpu.dimension_semantics<parallel>], iteration_bounds = array<i64: 2, 1>, scalar_prefetch = 1 : i64, scratch_operands = 0 : i64, tpu.core_type = #tpu.core_type<tc>, window_params = [{transform_indices = @transform_0, window_bounds = array<i64: 1, 1, 8, 8>}, {transform_indices = @transform_1, window_bounds = array<i64: 16, 8>}, {pipeline_mode = #tpu.pipeline_mode<synchronous>, transform_indices = @transform_2, window_bounds = array<i64: 8, 16>}, {transform_indices = @transform_3, window_bounds = array<i64: 1, 1, 16, 16>}]} {
    %c0 = arith.constant 0 : index
    %c0_0 = arith.constant 0 : index
    %c0_1 = arith.constant 0 : index
    %c0_2 = arith.constant 0 : index
    %0 = vector.load %arg3[%c0, %c0_0, %c0_1, %c0_2] : memref<1x1x8x8xbf16, #tpu.memory_space<vmem>>, vector<1x1x8x8xbf16>
    %1 = vector.shape_cast %0 : vector<1x1x8x8xbf16> to vector<8x8xbf16>
    %c0_3 = arith.constant 0 : index
    %c0_4 = arith.constant 0 : index
    %2 = vector.load %arg4[%c0_3, %c0_4] : memref<16x8xbf16, #tpu.memory_space<vmem>>, vector<16x8xbf16>
    %cst = arith.constant dense<0.000000e+00> : vector<16x8xf32>
    %3 = tpu.matmul %2, %1, %cst {dimension_numbers = #tpu.dot_dimension_numbers<[1], [0], [0], [1], [0, 0, 1, 1], [], []>} : vector<16x8xbf16>, vector<8x8xbf16>, vector<16x8xf32> -> vector<16x8xf32>
    %4 = arith.truncf %3 : vector<16x8xf32> to vector<16x8xbf16>
    %c0_5 = arith.constant 0 : index
    %c0_6 = arith.constant 0 : index
    %5 = vector.load %arg5[%c0_5, %c0_6] : memref<8x16xbf16, #tpu.memory_space<vmem>>, vector<8x16xbf16>
    %cst_7 = arith.constant dense<0.000000e+00> : vector<16x16xf32>
    %6 = tpu.matmul %4, %5, %cst_7 {dimension_numbers = #tpu.dot_dimension_numbers<[1], [0], [0], [1], [0, 0, 1, 1], [], []>} : vector<16x8xbf16>, vector<8x16xbf16>, vector<16x16xf32> -> vector<16x16xf32>
    %c0_8 = arith.constant 0 : index
    %c0_9 = arith.constant 0 : index
    %c0_10 = arith.constant 0 : index
    %c0_11 = arith.constant 0 : index
    %7 = vector.load %arg6[%c0_8, %c0_9, %c0_10, %c0_11] : memref<1x1x16x16xf32, #tpu.memory_space<vmem>>, vector<1x1x16x16xf32>
    %8 = vector.shape_cast %7 : vector<1x1x16x16xf32> to vector<16x16xf32>
    %9 = vector.shape_cast %6 : vector<16x16xf32> to vector<1x1x16x16xf32>
    tpu.vector_store %arg6[%c0_8, %c0_9, %c0_10, %c0_11], %9 {strides = array<i32>} : memref<1x1x16x16xf32, #tpu.memory_space<vmem>>, vector<1x1x16x16xf32>,
    return
  }
  func.func @transform_0(%arg0: i32, %arg1: i32, %arg2: memref<2xi32, #tpu.memory_space<smem>>) -> (i32, i32, i32, i32) {
    %0 = arith.index_cast %arg0 : i32 to index
    %1 = memref.load %arg2[%0] : memref<2xi32, #tpu.memory_space<smem>>
    %c0_i32 = arith.constant 0 : i32
    %c0_i32_0 = arith.constant 0 : i32
    %c0_i32_1 = arith.constant 0 : i32
    %c0_i32_2 = arith.constant 0 : i32
    return %1, %c0_i32, %c0_i32_0, %c0_i32_1 : i32, i32, i32, i32
  }
  func.func @transform_1(%arg0: i32, %arg1: i32, %arg2: memref<2xi32, #tpu.memory_space<smem>>) -> (i32, i32) {
    %c0_i32 = arith.constant 0 : i32
    %c0_i32_0 = arith.constant 0 : i32
    return %arg1, %c0_i32 : i32, i32
  }
  func.func @transform_2(%arg0: i32, %arg1: i32, %arg2: memref<2xi32, #tpu.memory_space<smem>>) -> (i32, i32) {
    %c0_i32 = arith.constant 0 : i32
    %c0_i32_0 = arith.constant 0 : i32
    %c0_i32_1 = arith.constant 0 : i32
    return %c0_i32, %c0_i32_0 : i32, i32
  }
  func.func @transform_3(%arg0: i32, %arg1: i32, %arg2: memref<2xi32, #tpu.memory_space<smem>>) -> (i32, i32, i32, i32) {
    %c0_i32 = arith.constant 0 : i32
    %c0_i32_0 = arith.constant 0 : i32
    %c0_i32_1 = arith.constant 0 : i32
    return %arg0, %c0_i32, %arg1, %c0_i32_0 : i32, i32, i32, i32
  }
}

</mosaic_0001>

<llo_original>
// kernel: tpu_custom_call.1
$region0: #{tpu_custom_call.1}
  #allocation0 [shape = 'u32[]', space=smem, size = 0x4, offset = 0x4, fixed_abs, tag = 'smem constant byte address 0x4 - core index']
  #allocation1 [shape = 'u32[72,128]{1,0:T(1,128)}', space=vmem, size = 0x9000, scoped, tag = 'internal scratch']
  #allocation2 [shape = 's32[1]{0}', space=sflag, size = 0x4, scoped, tag = 'scoped memory for tpu_custom_call.1']
  #allocation3 [shape = 'u8[512]{0}', space=smem, size = 0x200, scoped, tag = 'prefetched SMEM operand 0']
  %s0 = inlined_call_operand.vmem [shape: s32[2], index: 0, kind: input, shape index: {}]
  %s1 = inlined_call_operand.hbm [shape: bf16[4,1,8,8], index: 1, kind: input, shape index: {}]
  %s2 = inlined_call_operand.vmem [shape: bf16[16,8], index: 2, kind: input, shape index: {}]
  %s3 = inlined_call_operand.vmem [shape: bf16[8,16], index: 3, kind: input, shape index: {}]
  %s4 = inlined_call_operand.hbm [shape: f32[2,1,16,16], index: 4, kind: output, shape index: {}]
  %s5 = sld [smem:[#allocation0]]
  $region49: #{tpu_custom_call.1} parent=0
    _
  %s7 = ssub.s32 1, %s5
  %s8 = scalar_select 0, %s7, %s5
  %s10 = sshll.u32 %s0, 4
  %s11 = int_to_ptr.vmem [resolvable:$true] %s10
  %13 = dma.vmem_to_smem %s11, 16, [#allocation3], [#allocation2]
  %15 = dma.done [#allocation2], 16
  %16 = sfence
  $region1: #{tpu_custom_call.1} parent=0
    #allocation4 [shape = 'u8[4096]{0}', space=vmem, size = 0x1000, scoped, tag = 'input window, operand 1']
    #allocation5 [shape = 's32[2]{0}', space=sflag, size = 0x8, scoped, tag = 'scoped memory for tpu_custom_call.1']
    #allocation6 [shape = 's32[2]{0}', space=sflag, size = 0x8, scoped, tag = 'scoped memory for tpu_custom_call.1']
    #allocation7 [shape = 'u8[16384]{0}', space=vmem, size = 0x4000, scoped, tag = 'output window, operand 0']
    %17 = vsyncpa [#allocation5], 0
    %s18 = scalar_lea.sflag [#allocation5], 1
    %19 = vsyncpa %s18, 0
    %20 = vsyncpa [#allocation6], 0
    %s21 = scalar_lea.sflag [#allocation6], 1
    %22 = vsyncpa %s21, 0
    loop: start=0, step=1, limit=4
    $region2: #{tpu_custom_call.1} parent=1 // loop_pre_header
      _
    $region3: #{tpu_custom_call.1} parent=1 // loop_header
      %s24 = sphi 0, %s28
      %p25 = scmp.ge.s32.totalorder %s24, 4
      %s31 = sphi 0, %s43
      %s32 = sphi 0, %s39
      %s33 = sphi 0, %s31
      %s34 = sphi 0, %s32
      %s35 = sphi 0, %s33
      %s36 = sphi 0, %s34
      %s48 = sphi 0, %s50
      %s51 = sphi 0, %s48
      %s52 = sphi 0, %s51
      %s68 = sphi 0, %s52
      %s74 = sphi 0, %s76
      %s77 = sphi 0, %s74
      %s78 = sphi 0, %s77
      %s94 = sphi 0, %s78
      %s98 = sphi 0, %s98
      %s100 = sphi 0, %s98
      %s101 = sphi 0, %s100
      %s115 = sphi 0, %s101
      %s123 = sphi 0, %s125
      %s126 = sphi 0, %s123
      %s127 = sphi 0, %s126
      %s143 = sphi 0, %s127
    $region4: #{tpu_custom_call.1} parent=1 // loop_header_branch
      %27 = sbr.rel (%p25) target = $region8
    $region5: #{tpu_custom_call.1} parent=1 // loop_body
      %s29 = ssub.s32 %s24, 1
      %s30 = ssub.s32 %s24, 2
      %s37 = sadd.s32 1, %s32
      %p38 = scmp.ge.s32.totalorder %s37, 1
      %s39 = scalar_select %p38, 0, %s37
      %s40 = sadd.s32 1, %s31
      %s41 = scalar_select %p38, %s40, %s31
      %p42 = scmp.ge.s32.totalorder %s41, 2
      %s43 = scalar_select %p42, 0, %s41
      %s44 = sld [smem:[#allocation3 + %s31]]
      %s45 = sld [smem:[#allocation3 + %s43]]
      %s46 = ssub.s32 %s44, %s45
      %p47 = scmp.eq.s32.totalorder %s46, 0
      %s49 = sadd.s32 %s48, 1
      %s50 = scalar_select %p47, %s48, %s49
      %p53 = pneg %p47
      %p54 = scmp.eq.s32.totalorder %s24, 1
      %p55 = por %p53, %p54
      %p56 = scmp.ne.s32.totalorder %s48, %s51
      %p57 = scmp.eq.s32.totalorder %s24, 0
      %p58 = por %p56, %p57
      %p59 = scmp.ne.s32.totalorder %s48, %s51
      %p60 = scmp.eq.s32.totalorder %s29, 1
      %p61 = por %p59, %p60
      %p62 = scmp.ne.s32.totalorder %s51, %s52
      %p63 = scmp.eq.s32.totalorder %s29, 0
      %p64 = por %p62, %p63
      %p65 = scmp.ne.s32.totalorder %s51, %s52
      %p66 = scmp.eq.s32.totalorder %s30, 1
      %p67 = por %p65, %p66
      %p69 = scmp.ne.s32.totalorder %s52, %s68
      %p70 = scmp.eq.s32.totalorder %s30, 0
      %p71 = por %p69, %p70
      %s72 = ssub.s32 %s32, %s39
      %p73 = scmp.eq.s32.totalorder %s72, 0
      %s75 = sadd.s32 %s74, 1
      %s76 = scalar_select %p73, %s74, %s75
      %p79 = pneg %p73
      %p80 = scmp.eq.s32.totalorder %s24, 1
      %p81 = por %p79, %p80
      %p82 = scmp.ne.s32.totalorder %s74, %s77
      %p83 = scmp.eq.s32.totalorder %s24, 0
      %p84 = por %p82, %p83
      %p85 = scmp.ne.s32.totalorder %s74, %s77
      %p86 = scmp.eq.s32.totalorder %s29, 1
      %p87 = por %p85, %p86
      %p88 = scmp.ne.s32.totalorder %s77, %s78
      %p89 = scmp.eq.s32.totalorder %s29, 0
      %p90 = por %p88, %p89
      %p91 = scmp.ne.s32.totalorder %s77, %s78
      %p92 = scmp.eq.s32.totalorder %s30, 1
      %p93 = por %p91, %p92
      %p95 = scmp.ne.s32.totalorder %s78, %s94
      %p96 = scmp.eq.s32.totalorder %s30, 0
      %p97 = por %p95, %p96
      %s99 = sadd.s32 %s98, 1
      %p102 = scmp.eq.s32.totalorder %s24, 1
      %p103 = scmp.ne.s32.totalorder %s98, %s100
      %p104 = scmp.eq.s32.totalorder %s24, 0
      %p105 = por %p103, %p104
      %p106 = scmp.ne.s32.totalorder %s98, %s100
      %p107 = scmp.eq.s32.totalorder %s29, 1
      %p108 = por %p106, %p107
      %p109 = scmp.ne.s32.totalorder %s100, %s101
      %p110 = scmp.eq.s32.totalorder %s29, 0
      %p111 = por %p109, %p110
      %p112 = scmp.ne.s32.totalorder %s100, %s101
      %p113 = scmp.eq.s32.totalorder %s30, 1
      %p114 = por %p112, %p113
      %p116 = scmp.ne.s32.totalorder %s101, %s115
      %p117 = scmp.eq.s32.totalorder %s30, 0
      %p118 = por %p116, %p117
      %s119 = ssub.s32 %s31, %s43
      %s120 = ssub.s32 %s32, %s39
      %s121 = sor.u32 %s119, %s120
      %p122 = scmp.eq.s32.totalorder %s121, 0
      %s124 = sadd.s32 %s123, 1
      %s125 = scalar_select %p122, %s123, %s124
      %p128 = pneg %p122
      %p129 = scmp.eq.s32.totalorder %s24, 1
      %p130 = por %p128, %p129
      %p131 = scmp.ne.s32.totalorder %s123, %s126
      %p132 = scmp.eq.s32.totalorder %s24, 0
      %p133 = por %p131, %p132
      %p134 = scmp.ne.s32.totalorder %s123, %s126
      %p135 = scmp.eq.s32.totalorder %s29, 1
      %p136 = por %p134, %p135
      %p137 = scmp.ne.s32.totalorder %s126, %s127
      %p138 = scmp.eq.s32.totalorder %s29, 0
      %p139 = por %p137, %p138
      %p140 = scmp.ne.s32.totalorder %s126, %s127
      %p141 = scmp.eq.s32.totalorder %s30, 1
      %p142 = por %p140, %p141
      %p144 = scmp.ne.s32.totalorder %s127, %s143
      %p145 = scmp.eq.s32.totalorder %s30, 0
      %p146 = por %p144, %p145
      %p147 = scmp.le.s32.totalorder 1, %s24
      %p148 = scmp.lt.s32.totalorder %s24, 3
      %p149 = pnand %p147, %p148
      %p150 = pneg %p149
      // Predicated region
      $region9: #{tpu_custom_call.1} parent=5 // pred_check
        _
      $region10: #{tpu_custom_call.1} parent=5 // pred_check_branch
        %152 = sbr.rel (%p149) target = $region12
      $region11: #{tpu_custom_call.1} parent=5 // pred_region
        %s153 = ssub.s32 %s24, 1
        // Predicated region
        $region13: #{tpu_custom_call.1} parent=11 // pred_check
          %p154 = pneg %p90
        $region14: #{tpu_custom_call.1} parent=11 // pred_check_branch
          %156 = sbr.rel (%p154) target = $region16
        $region15: #{tpu_custom_call.1} parent=11 // pred_region
          %s157 = smul.u32 2, %s34
          %p158 = scmp.lt.s32.totalorder %s157, 1
          %s159 = scalar_select %p158, %s157, 1
          %s160 = smul.addr %s159, 4
          %s161 = scalar_lea.vmem %s2, %s160
          %s162 = smul.u32 2, %s34
        $region16: #{tpu_custom_call.1} parent=11 // pred_fallthru
          _
        // Predicated region
        $region17: #{tpu_custom_call.1} parent=11 // pred_check
          %p163 = pneg %p111
        $region18: #{tpu_custom_call.1} parent=11 // pred_check_branch
          %165 = sbr.rel (%p163) target = $region20
        $region19: #{tpu_custom_call.1} parent=11 // pred_region
          _
        $region20: #{tpu_custom_call.1} parent=11 // pred_fallthru
          _
      $region12: #{tpu_custom_call.1} parent=5 // pred_fallthru
        _
      %p166 = scmp.lt.s32.totalorder %s24, 2
      // Predicated region
      $region21: #{tpu_custom_call.1} parent=5 // pred_check
        %p167 = pneg %p166
      $region22: #{tpu_custom_call.1} parent=5 // pred_check_branch
        %169 = sbr.rel (%p167) target = $region24
      $region23: #{tpu_custom_call.1} parent=5 // pred_region
        // Predicated region
        $region25: #{tpu_custom_call.1} parent=23 // pred_check
          %p170 = pneg %p58
        $region26: #{tpu_custom_call.1} parent=23 // pred_check_branch
          %172 = sbr.rel (%p170) target = $region28
        $region27: #{tpu_custom_call.1} parent=23 // pred_region
          %s173 = sand.u32 %s48, 1
          %s174 = scalar_lea.sflag [#allocation5], %s173
          %s175 = sand.u32 %s48, 1
          %s176 = smul.addr %s175, 4
          %s177 = scalar_lea.vmem [#allocation4], %s176
          %s178 = sld [smem:[#allocation3 + %s31]]
          %180 = vsyncadd %s174, 0
          %s181 = smul.addr %s178, 4
          %s182 = scalar_lea.hbm %s1, %s181
          %s184 = sshll.u32 %s182, 4
          %s185 = int_to_ptr.hbm [resolvable:$true] %s184
          %s186 = sshll.u32 %s177, 4
          %s187 = int_to_ptr.vmem [resolvable:$true] %s186
          %189 = dma.hbm_to_vmem [thread:$0]  %s185, 64, %s187, %s174
        $region28: #{tpu_custom_call.1} parent=23 // pred_fallthru
          _
      $region24: #{tpu_custom_call.1} parent=5 // pred_fallthru
        _
      %p190 = scmp.le.s32.totalorder 1, %s24
      %p191 = scmp.lt.s32.totalorder %s24, 3
      %p192 = pnand %p190, %p191
      %p193 = pneg %p192
      // Predicated region
      $region29: #{tpu_custom_call.1} parent=5 // pred_check
        _
      $region30: #{tpu_custom_call.1} parent=5 // pred_check_branch
        %195 = sbr.rel (%p192) target = $region32
      $region31: #{tpu_custom_call.1} parent=5 // pred_region
        %s196 = ssub.s32 %s24, 1
        %s197 = sand.u32 %s51, 1
        %s198 = scalar_lea.sflag [#allocation5], %s197
        %s199 = sand.u32 %s51, 1
        %s200 = smul.addr %s199, 4
        %s201 = scalar_lea.vmem [#allocation4], %s200
        // Predicated region
        $region33: #{tpu_custom_call.1} parent=31 // pred_check
          %p202 = pneg %p64
        $region34: #{tpu_custom_call.1} parent=31 // pred_check_branch
          %204 = sbr.rel (%p202) target = $region36
        $region35: #{tpu_custom_call.1} parent=31 // pred_region
          %206 = dma.done %s198, 64
        $region36: #{tpu_custom_call.1} parent=31 // pred_fallthru
          _
        %s207 = sand.u32 %s51, 1
        %s208 = scalar_lea.sflag [#allocation5], %s207
        %s209 = sand.u32 %s51, 1
        %s210 = smul.addr %s209, 4
        %s211 = scalar_lea.vmem [#allocation4], %s210
        %p212 = pneg %p64
        %p213 = pneg %p61
        %s214 = smul.u32 2, %s34
        %p215 = scmp.lt.s32.totalorder %s214, 1
        %s216 = scalar_select %p215, %s214, 1
        %s217 = smul.addr %s216, 4
        %s218 = scalar_lea.vmem %s2, %s217
        %p219 = pneg %p90
        %p220 = pneg %p87
        %p221 = pneg %p111
        %p222 = pneg %p108
        %p223 = pneg %p139
        %p224 = pneg %p136
        %s225 = sand.u32 %s126, 1
        %s226 = scalar_lea.sflag [#allocation6], %s225
        %s227 = sand.u32 %s126, 1
        %s228 = smul.addr %s227, 16
        %s229 = scalar_lea.vmem [#allocation7], %s228
        %s230 = sld [smem:[#allocation3 + %s33]]
        %s231 = smul.u32 2, %s34
        %p232 = scmp.lt.s32.totalorder %s231, 1
        %s233 = scalar_select %p232, %s231, 1
        %s234 = smul.addr %s233, 4
        %s235 = scalar_lea.vmem %s2, %s234
        %s236 = smul.u32 2, %s34
        %s237 = smul.u32 2, %s34
        %v239 = vld [vmem:[%s201] sm:$0xf]
        %v240 = vld [vmem:[%s235] sm:$0xf]
        %v241 = vld [vmem:[%s235 + $0x4] sm:$0xf]
        %v244 = vunpack.c.l.b16 %v240
        %v245 = vunpack.c.l.b16 %v241
        %v246 = vpack.c.b16 %v245, %v244
        %vm247 = vcmask 64512
        %v249 = vsel %vm247, %v246, 0
        %vm251 = vcmask 1043456
        %v253 = vsel %vm251, %v239, 0
        %255 = vmatpush.bf16.msra.mxu0 0
        %256 = vmatpush.bf16.msra.mxu0 0
        %257 = vmatpush.bf16.msra.mxu0 0
        %258 = vmatpush.bf16.msra.mxu0 0
        %259 = vmatpush.bf16.msra.mxu0 0
        %260 = vmatpush.bf16.msra.mxu0 0
        %261 = vmatpush.bf16.msra.mxu0 0
        %262 = vmatpush.bf16.msra.mxu0 %v253
        %263 = vmatmul.bf16.gmra.mxu0 %v249
        %v264 = vpop.f32.mrf.mxu0
        %v265 = vadd.f32 0.0, %v264
        %v266 = vpop.f32.mrf.mxu0
        %v267 = vadd.f32 0.0, %v266
        %268 = vdwg.mxu0
        %v269 = vpack.c.bf16 %v267, %v265
        %v270 = vld [vmem:[%s3] sm:$0xf]
        %v272 = vsel %vm247, %v269, 0
        %v275 = vsel %vm251, %v270, 0
        %277 = vmatpush.bf16.msra.mxu0 0
        %278 = vmatpush.bf16.msra.mxu0 0
        %279 = vmatpush.bf16.msra.mxu0 0
        %280 = vmatpush.bf16.msra.mxu0 0
        %281 = vmatpush.bf16.msra.mxu0 0
        %282 = vmatpush.bf16.msra.mxu0 0
        %283 = vmatpush.bf16.msra.mxu0 0
        %284 = vmatpush.bf16.msra.mxu0 %v275
        %285 = vmatmul.bf16.gmra.mxu0 %v272
        %v286 = vpop.f32.mrf.mxu0
        %v287 = vadd.f32 0.0, %v286
        %v288 = vpop.f32.mrf.mxu0
        %v289 = vadd.f32 0.0, %v288
        %290 = vdwg.mxu0
        %vm291 = vcmask 130048
        %292 = vst.msk [vmem:[%s229] sm:$0xff] %vm291, %v287
        %293 = vst.msk [vmem:[%s229 + $0x8] sm:$0xff] %vm291, %v289
        %s294 = sand.u32 %s126, 1
        %s295 = scalar_lea.sflag [#allocation6], %s294
        %s296 = sand.u32 %s126, 1
        %s297 = smul.addr %s296, 16
        %s298 = scalar_lea.vmem [#allocation7], %s297
        // Predicated region
        $region37: #{tpu_custom_call.1} parent=31 // pred_check
          %p299 = pneg %p136
        $region38: #{tpu_custom_call.1} parent=31 // pred_check_branch
          %301 = sbr.rel (%p299) target = $region40
        $region39: #{tpu_custom_call.1} parent=31 // pred_region
          %s302 = smul.u32 2, %s34
          %304 = vsyncadd %s295, 0
          %s305 = smul.addr %s33, 2
          %s306 = sadd.s32 %s302, %s305
          %s307 = smul.addr %s306, 8
          %s308 = scalar_lea.hbm %s4, %s307
          %s309 = sshll.u32 %s298, 4
          %s310 = int_to_ptr.vmem [resolvable:$true] %s309
          %s311 = sshll.u32 %s308, 4
          %s312 = int_to_ptr.hbm [resolvable:$true] %s311
          %317 = dma.vmem_to_hbm [thread:$0]  %s310, 256, %s312, %s295, 128, 128, 8
        $region40: #{tpu_custom_call.1} parent=31 // pred_fallthru
          _
      $region32: #{tpu_custom_call.1} parent=5 // pred_fallthru
        _
      %p318 = scmp.le.s32.totalorder 2, %s24
      // Predicated region
      $region41: #{tpu_custom_call.1} parent=5 // pred_check
        %p319 = pneg %p318
      $region42: #{tpu_custom_call.1} parent=5 // pred_check_branch
        %321 = sbr.rel (%p319) target = $region44
      $region43: #{tpu_custom_call.1} parent=5 // pred_region
        %s322 = ssub.s32 %s24, 2
        // Predicated region
        $region45: #{tpu_custom_call.1} parent=43 // pred_check
          %p323 = pneg %p142
        $region46: #{tpu_custom_call.1} parent=43 // pred_check_branch
          %325 = sbr.rel (%p323) target = $region48
        $region47: #{tpu_custom_call.1} parent=43 // pred_region
          %s326 = sand.u32 %s127, 1
          %s327 = scalar_lea.sflag [#allocation6], %s326
          %s328 = sand.u32 %s127, 1
          %s329 = smul.addr %s328, 16
          %s330 = scalar_lea.vmem [#allocation7], %s329
          %332 = dma.done %s327, 256
        $region48: #{tpu_custom_call.1} parent=43 // pred_fallthru
          _
      $region44: #{tpu_custom_call.1} parent=5 // pred_fallthru
        _
    $region6: #{tpu_custom_call.1} parent=1 // loop_footer
      %s28 = sadd.s32 1, %s24
    $region7: #{tpu_custom_call.1} parent=1 // loop_footer_branch
      %23 = sbr.rel target = $region3
    $region8: #{tpu_custom_call.1} parent=1 // loop_exit
      _
    %333 = vsyncpa [#allocation5], 1
    %s334 = scalar_lea.sflag [#allocation5], 1
    %335 = vsyncpa %s334, 1
    %336 = vsyncpa [#allocation6], 1
    %s337 = scalar_lea.sflag [#allocation6], 1
    %338 = vsyncpa %s337, 1

// kernel: tpu_custom_call.1
$region0: #{tpu_custom_call.1}
  #allocation0 [shape = 'u32[]', space=smem, size = 0x4, offset = 0x4, fixed_abs, tag = 'smem constant byte address 0x4 - core index']
  #allocation1 [shape = 'u32[72,128]{1,0:T(1,128)}', space=vmem, size = 0x9000, scoped, tag = 'internal scratch']
  #allocation2 [shape = 's32[1]{0}', space=sflag, size = 0x4, scoped, tag = 'scoped memory for tpu_custom_call.1']
  #allocation3 [shape = 'u8[512]{0}', space=smem, size = 0x200, scoped, tag = 'prefetched SMEM operand 0']
  %s0 = inlined_call_operand.vmem [shape: s32[2], index: 0, kind: input, shape index: {}]
  %s1 = inlined_call_operand.hbm [shape: bf16[4,1,8,8], index: 1, kind: input, shape index: {}]
  %s2 = inlined_call_operand.vmem [shape: bf16[16,8], index: 2, kind: input, shape index: {}]
  %s3 = inlined_call_operand.vmem [shape: bf16[8,16], index: 3, kind: input, shape index: {}]
  %s4 = inlined_call_operand.hbm [shape: f32[2,1,16,16], index: 4, kind: output, shape index: {}]
  %s5 = sld [smem:[#allocation0]]
  $region49: #{tpu_custom_call.1} parent=0
    _
  %s7 = ssub.s32 1, %s5
  %s8 = scalar_select 0, %s7, %s5
  %s10 = sshll.u32 %s0, 4
  %s11 = int_to_ptr.vmem [resolvable:$true] %s10
  %13 = dma.vmem_to_smem %s11, 16, [#allocation3], [#allocation2]
  %15 = dma.done [#allocation2], 16
  %16 = sfence
  $region1: #{tpu_custom_call.1} parent=0
    #allocation4 [shape = 'u8[4096]{0}', space=vmem, size = 0x1000, scoped, tag = 'input window, operand 1']
    #allocation5 [shape = 's32[2]{0}', space=sflag, size = 0x8, scoped, tag = 'scoped memory for tpu_custom_call.1']
    #allocation6 [shape = 's32[2]{0}', space=sflag, size = 0x8, scoped, tag = 'scoped memory for tpu_custom_call.1']
    #allocation7 [shape = 'u8[16384]{0}', space=vmem, size = 0x4000, scoped, tag = 'output window, operand 0']
    %17 = vsyncpa [#allocation5], 0
    %s18 = scalar_lea.sflag [#allocation5], 1
    %19 = vsyncpa %s18, 0
    %20 = vsyncpa [#allocation6], 0
    %s21 = scalar_lea.sflag [#allocation6], 1
    %22 = vsyncpa %s21, 0
    loop: start=0, step=1, limit=4
    $region2: #{tpu_custom_call.1} parent=1 // loop_pre_header
      _
    $region3: #{tpu_custom_call.1} parent=1 // loop_header
      %s24 = sphi 0, %s28
      %p25 = scmp.ge.s32.totalorder %s24, 4
      %s31 = sphi 0, %s43
      %s32 = sphi 0, %s39
      %s33 = sphi 0, %s31
      %s34 = sphi 0, %s32
      %s35 = sphi 0, %s33
      %s36 = sphi 0, %s34
      %s48 = sphi 0, %s50
      %s51 = sphi 0, %s48
      %s52 = sphi 0, %s51
      %s68 = sphi 0, %s52
      %s74 = sphi 0, %s76
      %s77 = sphi 0, %s74
      %s78 = sphi 0, %s77
      %s94 = sphi 0, %s78
      %s98 = sphi 0, %s98
      %s100 = sphi 0, %s98
      %s101 = sphi 0, %s100
      %s115 = sphi 0, %s101
      %s123 = sphi 0, %s125
      %s126 = sphi 0, %s123
      %s127 = sphi 0, %s126
      %s143 = sphi 0, %s127
    $region4: #{tpu_custom_call.1} parent=1 // loop_header_branch
      %27 = sbr.rel (%p25) target = $region8
    $region5: #{tpu_custom_call.1} parent=1 // loop_body
      %s29 = ssub.s32 %s24, 1
      %s30 = ssub.s32 %s24, 2
      %s37 = sadd.s32 1, %s32
      %p38 = scmp.ge.s32.totalorder %s37, 1
      %s39 = scalar_select %p38, 0, %s37
      %s40 = sadd.s32 1, %s31
      %s41 = scalar_select %p38, %s40, %s31
      %p42 = scmp.ge.s32.totalorder %s41, 2
      %s43 = scalar_select %p42, 0, %s41
      %s44 = sld [smem:[#allocation3 + %s31]]
      %s45 = sld [smem:[#allocation3 + %s43]]
      %s46 = ssub.s32 %s44, %s45
      %p47 = scmp.eq.s32.totalorder %s46, 0
      %s49 = sadd.s32 %s48, 1
      %s50 = scalar_select %p47, %s48, %s49
      %p53 = pneg %p47
      %p54 = scmp.eq.s32.totalorder %s24, 1
      %p55 = por %p53, %p54
      %p56 = scmp.ne.s32.totalorder %s48, %s51
      %p57 = scmp.eq.s32.totalorder %s24, 0
      %p58 = por %p56, %p57
      %p59 = scmp.ne.s32.totalorder %s48, %s51
      %p60 = scmp.eq.s32.totalorder %s29, 1
      %p61 = por %p59, %p60
      %p62 = scmp.ne.s32.totalorder %s51, %s52
      %p63 = scmp.eq.s32.totalorder %s29, 0
      %p64 = por %p62, %p63
      %p65 = scmp.ne.s32.totalorder %s51, %s52
      %p66 = scmp.eq.s32.totalorder %s30, 1
      %p67 = por %p65, %p66
      %p69 = scmp.ne.s32.totalorder %s52, %s68
      %p70 = scmp.eq.s32.totalorder %s30, 0
      %p71 = por %p69, %p70
      %s72 = ssub.s32 %s32, %s39
      %p73 = scmp.eq.s32.totalorder %s72, 0
      %s75 = sadd.s32 %s74, 1
      %s76 = scalar_select %p73, %s74, %s75
      %p79 = pneg %p73
      %p80 = scmp.eq.s32.totalorder %s24, 1
      %p81 = por %p79, %p80
      %p82 = scmp.ne.s32.totalorder %s74, %s77
      %p83 = scmp.eq.s32.totalorder %s24, 0
      %p84 = por %p82, %p83
      %p85 = scmp.ne.s32.totalorder %s74, %s77
      %p86 = scmp.eq.s32.totalorder %s29, 1
      %p87 = por %p85, %p86
      %p88 = scmp.ne.s32.totalorder %s77, %s78
      %p89 = scmp.eq.s32.totalorder %s29, 0
      %p90 = por %p88, %p89
      %p91 = scmp.ne.s32.totalorder %s77, %s78
      %p92 = scmp.eq.s32.totalorder %s30, 1
      %p93 = por %p91, %p92
      %p95 = scmp.ne.s32.totalorder %s78, %s94
      %p96 = scmp.eq.s32.totalorder %s30, 0
      %p97 = por %p95, %p96
      %s99 = sadd.s32 %s98, 1
      %p102 = scmp.eq.s32.totalorder %s24, 1
      %p103 = scmp.ne.s32.totalorder %s98, %s100
      %p104 = scmp.eq.s32.totalorder %s24, 0
      %p105 = por %p103, %p104
      %p106 = scmp.ne.s32.totalorder %s98, %s100
      %p107 = scmp.eq.s32.totalorder %s29, 1
      %p108 = por %p106, %p107
      %p109 = scmp.ne.s32.totalorder %s100, %s101
      %p110 = scmp.eq.s32.totalorder %s29, 0
      %p111 = por %p109, %p110
      %p112 = scmp.ne.s32.totalorder %s100, %s101
      %p113 = scmp.eq.s32.totalorder %s30, 1
      %p114 = por %p112, %p113
      %p116 = scmp.ne.s32.totalorder %s101, %s115
      %p117 = scmp.eq.s32.totalorder %s30, 0
      %p118 = por %p116, %p117
      %s119 = ssub.s32 %s31, %s43
      %s120 = ssub.s32 %s32, %s39
      %s121 = sor.u32 %s119, %s120
      %p122 = scmp.eq.s32.totalorder %s121, 0
      %s124 = sadd.s32 %s123, 1
      %s125 = scalar_select %p122, %s123, %s124
      %p128 = pneg %p122
      %p129 = scmp.eq.s32.totalorder %s24, 1
      %p130 = por %p128, %p129
      %p131 = scmp.ne.s32.totalorder %s123, %s126
      %p132 = scmp.eq.s32.totalorder %s24, 0
      %p133 = por %p131, %p132
      %p134 = scmp.ne.s32.totalorder %s123, %s126
      %p135 = scmp.eq.s32.totalorder %s29, 1
      %p136 = por %p134, %p135
      %p137 = scmp.ne.s32.totalorder %s126, %s127
      %p138 = scmp.eq.s32.totalorder %s29, 0
      %p139 = por %p137, %p138
      %p140 = scmp.ne.s32.totalorder %s126, %s127
      %p141 = scmp.eq.s32.totalorder %s30, 1
      %p142 = por %p140, %p141
      %p144 = scmp.ne.s32.totalorder %s127, %s143
      %p145 = scmp.eq.s32.totalorder %s30, 0
      %p146 = por %p144, %p145
      %p147 = scmp.le.s32.totalorder 1, %s24
      %p148 = scmp.lt.s32.totalorder %s24, 3
      %p149 = pnand %p147, %p148
      %p150 = pneg %p149
      // Predicated region
      $region9: #{tpu_custom_call.1} parent=5 // pred_check
        _
      $region10: #{tpu_custom_call.1} parent=5 // pred_check_branch
        %152 = sbr.rel (%p149) target = $region12
      $region11: #{tpu_custom_call.1} parent=5 // pred_region
        %s153 = ssub.s32 %s24, 1
        // Predicated region
        $region13: #{tpu_custom_call.1} parent=11 // pred_check
          %p154 = pneg %p90
        $region14: #{tpu_custom_call.1} parent=11 // pred_check_branch
          %156 = sbr.rel (%p154) target = $region16
        $region15: #{tpu_custom_call.1} parent=11 // pred_region
          %s157 = smul.u32 2, %s34
          %p158 = scmp.lt.s32.totalorder %s157, 1
          %s159 = scalar_select %p158, %s157, 1
          %s160 = smul.addr %s159, 4
          %s161 = scalar_lea.vmem %s2, %s160
          %s162 = smul.u32 2, %s34
        $region16: #{tpu_custom_call.1} parent=11 // pred_fallthru
          _
        // Predicated region
        $region17: #{tpu_custom_call.1} parent=11 // pred_check
          %p163 = pneg %p111
        $region18: #{tpu_custom_call.1} parent=11 // pred_check_branch
          %165 = sbr.rel (%p163) target = $region20
        $region19: #{tpu_custom_call.1} parent=11 // pred_region
          _
        $region20: #{tpu_custom_call.1} parent=11 // pred_fallthru
          _
      $region12: #{tpu_custom_call.1} parent=5 // pred_fallthru
        _
      %p166 = scmp.lt.s32.totalorder %s24, 2
      // Predicated region
      $region21: #{tpu_custom_call.1} parent=5 // pred_check
        %p167 = pneg %p166
      $region22: #{tpu_custom_call.1} parent=5 // pred_check_branch
        %169 = sbr.rel (%p167) target = $region24
      $region23: #{tpu_custom_call.1} parent=5 // pred_region
        // Predicated region
        $region25: #{tpu_custom_call.1} parent=23 // pred_check
          %p170 = pneg %p58
        $region26: #{tpu_custom_call.1} parent=23 // pred_check_branch
          %172 = sbr.rel (%p170) target = $region28
        $region27: #{tpu_custom_call.1} parent=23 // pred_region
          %s173 = sand.u32 %s48, 1
          %s174 = scalar_lea.sflag [#allocation5], %s173
          %s175 = sand.u32 %s48, 1
          %s176 = smul.addr %s175, 4
          %s177 = scalar_lea.vmem [#allocation4], %s176
          %s178 = sld [smem:[#allocation3 + %s31]]
          %180 = vsyncadd %s174, 0
          %s181 = smul.addr %s178, 4
          %s182 = scalar_lea.hbm %s1, %s181
          %s184 = sshll.u32 %s182, 4
          %s185 = int_to_ptr.hbm [resolvable:$true] %s184
          %s186 = sshll.u32 %s177, 4
          %s187 = int_to_ptr.vmem [resolvable:$true] %s186
          %189 = dma.hbm_to_vmem [thread:$0]  %s185, 64, %s187, %s174
        $region28: #{tpu_custom_call.1} parent=23 // pred_fallthru
          _
      $region24: #{tpu_custom_call.1} parent=5 // pred_fallthru
        _
      %p190 = scmp.le.s32.totalorder 1, %s24
      %p191 = scmp.lt.s32.totalorder %s24, 3
      %p192 = pnand %p190, %p191
      %p193 = pneg %p192
      // Predicated region
      $region29: #{tpu_custom_call.1} parent=5 // pred_check
        _
      $region30: #{tpu_custom_call.1} parent=5 // pred_check_branch
        %195 = sbr.rel (%p192) target = $region32
      $region31: #{tpu_custom_call.1} parent=5 // pred_region
        %s196 = ssub.s32 %s24, 1
        %s197 = sand.u32 %s51, 1
        %s198 = scalar_lea.sflag [#allocation5], %s197
        %s199 = sand.u32 %s51, 1
        %s200 = smul.addr %s199, 4
        %s201 = scalar_lea.vmem [#allocation4], %s200
        // Predicated region
        $region33: #{tpu_custom_call.1} parent=31 // pred_check
          %p202 = pneg %p64
        $region34: #{tpu_custom_call.1} parent=31 // pred_check_branch
          %204 = sbr.rel (%p202) target = $region36
        $region35: #{tpu_custom_call.1} parent=31 // pred_region
          %206 = dma.done %s198, 64
        $region36: #{tpu_custom_call.1} parent=31 // pred_fallthru
          _
        %s207 = sand.u32 %s51, 1
        %s208 = scalar_lea.sflag [#allocation5], %s207
        %s209 = sand.u32 %s51, 1
        %s210 = smul.addr %s209, 4
        %s211 = scalar_lea.vmem [#allocation4], %s210
        %p212 = pneg %p64
        %p213 = pneg %p61
        %s214 = smul.u32 2, %s34
        %p215 = scmp.lt.s32.totalorder %s214, 1
        %s216 = scalar_select %p215, %s214, 1
        %s217 = smul.addr %s216, 4
        %s218 = scalar_lea.vmem %s2, %s217
        %p219 = pneg %p90
        %p220 = pneg %p87
        %p221 = pneg %p111
        %p222 = pneg %p108
        %p223 = pneg %p139
        %p224 = pneg %p136
        %s225 = sand.u32 %s126, 1
        %s226 = scalar_lea.sflag [#allocation6], %s225
        %s227 = sand.u32 %s126, 1
        %s228 = smul.addr %s227, 16
        %s229 = scalar_lea.vmem [#allocation7], %s228
        %s230 = sld [smem:[#allocation3 + %s33]]
        %s231 = smul.u32 2, %s34
        %p232 = scmp.lt.s32.totalorder %s231, 1
        %s233 = scalar_select %p232, %s231, 1
        %s234 = smul.addr %s233, 4
        %s235 = scalar_lea.vmem %s2, %s234
        %s236 = smul.u32 2, %s34
        %s237 = smul.u32 2, %s34
        %v239 = vld [vmem:[%s201] sm:$0xf]
        %v240 = vld [vmem:[%s235] sm:$0xf]
        %v241 = vld [vmem:[%s235 + $0x4] sm:$0xf]
        %v244 = vunpack.c.l.b16 %v240
        %v245 = vunpack.c.l.b16 %v241
        %v246 = vpack.c.b16 %v245, %v244
        %vm247 = vcmask 64512
        %v249 = vsel %vm247, %v246, 0
        %vm251 = vcmask 1043456
        %v253 = vsel %vm251, %v239, 0
        %255 = vmatpush.bf16.msra.mxu0 0
        %256 = vmatpush.bf16.msra.mxu0 0
        %257 = vmatpush.bf16.msra.mxu0 0
        %258 = vmatpush.bf16.msra.mxu0 0
        %259 = vmatpush.bf16.msra.mxu0 0
        %260 = vmatpush.bf16.msra.mxu0 0
        %261 = vmatpush.bf16.msra.mxu0 0
        %262 = vmatpush.bf16.msra.mxu0 %v253
        %263 = vmatmul.bf16.gmra.mxu0 %v249
        %v264 = vpop.f32.mrf.mxu0
        %v265 = vadd.f32 0.0, %v264
        %v266 = vpop.f32.mrf.mxu0
        %v267 = vadd.f32 0.0, %v266
        %268 = vdwg.mxu0
        %v269 = vpack.c.bf16 %v267, %v265
        %v270 = vld [vmem:[%s3] sm:$0xf]
        %v272 = vsel %vm247, %v269, 0
        %v275 = vsel %vm251, %v270, 0
        %277 = vmatpush.bf16.msra.mxu0 0
        %278 = vmatpush.bf16.msra.mxu0 0
        %279 = vmatpush.bf16.msra.mxu0 0
        %280 = vmatpush.bf16.msra.mxu0 0
        %281 = vmatpush.bf16.msra.mxu0 0
        %282 = vmatpush.bf16.msra.mxu0 0
        %283 = vmatpush.bf16.msra.mxu0 0
        %284 = vmatpush.bf16.msra.mxu0 %v275
        %285 = vmatmul.bf16.gmra.mxu0 %v272
        %v286 = vpop.f32.mrf.mxu0
        %v287 = vadd.f32 0.0, %v286
        %v288 = vpop.f32.mrf.mxu0
        %v289 = vadd.f32 0.0, %v288
        %290 = vdwg.mxu0
        %vm291 = vcmask 130048
        %292 = vst.msk [vmem:[%s229] sm:$0xff] %vm291, %v287
        %293 = vst.msk [vmem:[%s229 + $0x8] sm:$0xff] %vm291, %v289
        %s294 = sand.u32 %s126, 1
        %s295 = scalar_lea.sflag [#allocation6], %s294
        %s296 = sand.u32 %s126, 1
        %s297 = smul.addr %s296, 16
        %s298 = scalar_lea.vmem [#allocation7], %s297
        // Predicated region
        $region37: #{tpu_custom_call.1} parent=31 // pred_check
          %p299 = pneg %p136
        $region38: #{tpu_custom_call.1} parent=31 // pred_check_branch
          %301 = sbr.rel (%p299) target = $region40
        $region39: #{tpu_custom_call.1} parent=31 // pred_region
          %s302 = smul.u32 2, %s34
          %304 = vsyncadd %s295, 0
          %s305 = smul.addr %s33, 2
          %s306 = sadd.s32 %s302, %s305
          %s307 = smul.addr %s306, 8
          %s308 = scalar_lea.hbm %s4, %s307
          %s309 = sshll.u32 %s298, 4
          %s310 = int_to_ptr.vmem [resolvable:$true] %s309
          %s311 = sshll.u32 %s308, 4
          %s312 = int_to_ptr.hbm [resolvable:$true] %s311
          %317 = dma.vmem_to_hbm [thread:$0]  %s310, 256, %s312, %s295, 128, 128, 8
        $region40: #{tpu_custom_call.1} parent=31 // pred_fallthru
          _
      $region32: #{tpu_custom_call.1} parent=5 // pred_fallthru
        _
      %p318 = scmp.le.s32.totalorder 2, %s24
      // Predicated region
      $region41: #{tpu_custom_call.1} parent=5 // pred_check
        %p319 = pneg %p318
      $region42: #{tpu_custom_call.1} parent=5 // pred_check_branch
        %321 = sbr.rel (%p319) target = $region44
      $region43: #{tpu_custom_call.1} parent=5 // pred_region
        %s322 = ssub.s32 %s24, 2
        // Predicated region
        $region45: #{tpu_custom_call.1} parent=43 // pred_check
          %p323 = pneg %p142
        $region46: #{tpu_custom_call.1} parent=43 // pred_check_branch
          %325 = sbr.rel (%p323) target = $region48
        $region47: #{tpu_custom_call.1} parent=43 // pred_region
          %s326 = sand.u32 %s127, 1
          %s327 = scalar_lea.sflag [#allocation6], %s326
          %s328 = sand.u32 %s127, 1
          %s329 = smul.addr %s328, 16
          %s330 = scalar_lea.vmem [#allocation7], %s329
          %332 = dma.done %s327, 256
        $region48: #{tpu_custom_call.1} parent=43 // pred_fallthru
          _
      $region44: #{tpu_custom_call.1} parent=5 // pred_fallthru
        _
    $region6: #{tpu_custom_call.1} parent=1 // loop_footer
      %s28 = sadd.s32 1, %s24
    $region7: #{tpu_custom_call.1} parent=1 // loop_footer_branch
      %23 = sbr.rel target = $region3
    $region8: #{tpu_custom_call.1} parent=1 // loop_exit
      _
    %333 = vsyncpa [#allocation5], 1
    %s334 = scalar_lea.sflag [#allocation5], 1
    %335 = vsyncpa %s334, 1
    %336 = vsyncpa [#allocation6], 1
    %s337 = scalar_lea.sflag [#allocation6], 1
    %338 = vsyncpa %s337, 1

</llo_original>
